<compile_context>
chip_gen: v7x
topology: tpu7x:2x2x1
jax: 0.10.0
libtpu: 0.0.40
codegen_flags: <defaults>
</compile_context>

<pallas_src>
import math

import jax
import jax.numpy as jnp
from jax.experimental import pallas as pl
from jax.experimental.pallas import tpu as pltpu


# ----------------------------------------------------------------------------
# helpers
# ----------------------------------------------------------------------------
def _round_up(x, m):
    return ((x + m - 1) // m) * m


def _sublane_multiple(dtype):
    # Sub-32-bit dtypes pack along sublanes: bf16 rows travel in pairs,
    # 8-bit in quads. Round the M-tile accordingly.
    return {4: 8, 2: 16, 1: 32}.get(jnp.dtype(dtype).itemsize, 8)


def _vmem_cap_bytes():
    try:
        return int(pltpu.get_tpu_info().vmem_capacity_bytes)
    except Exception:
        return 64 * 1024 * 1024  # conservative (v7x per-TensorCore)


# ----------------------------------------------------------------------------
# kernels
# ----------------------------------------------------------------------------
def _linear_kernel_acc_out(x_ref, w_ref, b_ref, o_ref):
    """f32 output: accumulate straight into the resident output block."""
    k = pl.program_id(2)

    @pl.when(k == 0)
    def _():
        o_ref[...] = jnp.broadcast_to(b_ref[...], o_ref.shape).astype(o_ref.dtype)

    o_ref[...] += jnp.dot(x_ref[...], w_ref[...],
                          preferred_element_type=jnp.float32)


def _linear_kernel_scratch(x_ref, w_ref, b_ref, o_ref, acc_ref):
    """Narrow output dtype: f32 accumulator scratch, cast+store at last k."""
    k = pl.program_id(2)

    @pl.when(k == 0)
    def _():
        acc_ref[...] = jnp.broadcast_to(b_ref[...], acc_ref.shape)

    acc_ref[...] += jnp.dot(x_ref[...], w_ref[...],
                            preferred_element_type=jnp.float32)

    @pl.when(k == pl.num_programs(2) - 1)
    def _():
        o_ref[...] = acc_ref[...].astype(o_ref.dtype)


# ----------------------------------------------------------------------------
# pallas_call on already-padded operands
# ----------------------------------------------------------------------------
def _linear_padded(x_pad, w_pad, b_pad, *, out_dtype, tm_eff, tn_eff, tk_eff):
    Mp, Kp = x_pad.shape
    Kp2, Np = w_pad.shape
    assert Kp == Kp2
    assert Mp % tm_eff == 0 and Np % tn_eff == 0 and Kp % tk_eff == 0

    grid = (Mp // tm_eff, Np // tn_eff, Kp // tk_eff)
    gm, gn, gk = grid

    use_scratch = jnp.dtype(out_dtype) != jnp.dtype(jnp.float32)
    kernel = _linear_kernel_scratch if use_scratch else _linear_kernel_acc_out
    scratch = ([pltpu.VMEM((tm_eff, tn_eff), jnp.float32)] if use_scratch else [])

    x_elt = jnp.dtype(x_pad.dtype).itemsize
    w_elt = jnp.dtype(w_pad.dtype).itemsize
    out_elt = jnp.dtype(out_dtype).itemsize

    # Double-buffered x/w/out tiles (+ optional f32 acc scratch + bias).
    vmem_est = (2 * tm_eff * tk_eff * x_elt
                + 2 * tk_eff * tn_eff * w_elt
                + 2 * tm_eff * tn_eff * out_elt
                + (tm_eff * tn_eff * 4 if use_scratch else 0)
                + 2 * tn_eff * 4)
    cap = _vmem_cap_bytes()
    vmem_limit = int(min(max(2 * vmem_est, 32 * 1024 * 1024),
                         int(0.8 * cap)))
    vmem_limit = max(vmem_limit, int(1.25 * vmem_est))  # never below footprint

    # Honest reuse accounting: x is re-read gn times, w re-read gm times.
    cost = pl.CostEstimate(
        flops=2 * Mp * Np * Kp,
        transcendentals=0,
        bytes_accessed=(x_elt * Mp * Kp * gn
                        + w_elt * Kp * Np * gm
                        + out_elt * Mp * Np
                        + 4 * Np * gm),
    )

    return pl.pallas_call(
        kernel,
        out_shape=jax.ShapeDtypeStruct((Mp, Np), out_dtype),
        grid_spec=pltpu.PrefetchScalarGridSpec(
            num_scalar_prefetch=0,
            grid=grid,
            in_specs=[
                pl.BlockSpec((tm_eff, tk_eff), lambda i, j, k: (i, k)),  # x
                pl.BlockSpec((tk_eff, tn_eff), lambda i, j, k: (k, j)),  # w
                pl.BlockSpec((1, tn_eff), lambda i, j, k: (0, j)),       # bias
            ],
            out_specs=pl.BlockSpec((tm_eff, tn_eff), lambda i, j, k: (i, j)),
            scratch_shapes=scratch,
        ),
        compiler_params=pltpu.CompilerParams(
            dimension_semantics=("parallel", "parallel", "arbitrary"),
            vmem_limit_bytes=vmem_limit,
        ),
        cost_estimate=cost,
    )(x_pad, w_pad, b_pad)


# ----------------------------------------------------------------------------
# module-like wrapper: pads / casts weights ONCE at construction
# ----------------------------------------------------------------------------
class PallasLinear:
    """Equivalent of nn.Linear(input_dim, output_dim) forward.

    w: [K, N] (PyTorch weight transposed), b: [N].
    compute_dtype: optionally cast x/w (e.g. jnp.bfloat16 on v6e/v7x);
    accumulation and the bias add always stay in float32.
    """

    def __init__(self, w, b, *, tm=None, tn=None, tk=512,
                 compute_dtype=None, out_dtype=None):
        K, N = w.shape
        assert b.shape == (N,)
        self.K, self.N = K, N
        self.compute_dtype = compute_dtype
        self.out_dtype = out_dtype

        cd = compute_dtype if compute_dtype is not None else w.dtype
        narrow = jnp.dtype(cd).itemsize <= 2
        # Bigger tiles for narrow compute dtypes (bf16 MXU path on v6e/v7x).
        self.tm = tm if tm is not None else (1024 if narrow else 512)
        tn = tn if tn is not None else (1024 if narrow else 512)

        self.tn_eff = min(tn, _round_up(N, 128))
        self.tk_eff = min(tk, _round_up(K, 128))
        Np = _round_up(N, self.tn_eff)
        Kp = _round_up(K, self.tk_eff)

        wd = w if compute_dtype is None else w.astype(compute_dtype)
        if (Kp, Np) != (K, N):
            wd = jnp.pad(wd, ((0, Kp - K), (0, Np - N)))
        self.w_pad = wd
        self.b_pad = jnp.pad(b.astype(jnp.float32), (0, Np - N)).reshape(1, Np)

    def __call__(self, x):
        K, N = self.K, self.N
        assert x.shape[-1] == K
        out_dtype = self.out_dtype if self.out_dtype is not None else x.dtype

        lead = x.shape[:-1]
        M = int(math.prod(lead)) if lead else 1
        x2 = x.reshape(M, K)
        if self.compute_dtype is not None:
            x2 = x2.astype(self.compute_dtype)

        Kp, Np = self.w_pad.shape
        sub = _sublane_multiple(x2.dtype)
        tm_eff = min(self.tm, _round_up(M, sub))
        Mp = _round_up(M, tm_eff)

        # Guarantee >=2 blocks on a parallel axis when the problem allows it
        # (so 2-TC chips such as v7x can shard the grid across cores).
        if Mp // tm_eff == 1 and Np // self.tn_eff == 1 and M >= 2 * sub:
            tm_eff = _round_up(-(-M // 2), sub)
            Mp = _round_up(M, tm_eff)

        if (Mp, Kp) != (M, K):
            x2 = jnp.pad(x2, ((0, Mp - M), (0, Kp - K)))

        out = _linear_padded(x2, self.w_pad, self.b_pad,
                             out_dtype=out_dtype, tm_eff=tm_eff,
                             tn_eff=self.tn_eff, tk_eff=self.tk_eff)
        return out[:M, :N].reshape(*lead, N)


def linear_forward(x, w, b, **kwargs):
    """One-off convenience wrapper (pads weights per call)."""
    return PallasLinear(w, b, **kwargs)(x)


# ----------------------------------------------------------------------------
# demo / self-test
# ----------------------------------------------------------------------------
if __name__ == "__main__":
    key = jax.random.PRNGKey(0)
    keys = jax.random.split(key, 6)

    # --- Demo-scale check (nn.Linear(input_dim, output_dim)) ---
    batch, input_dim, output_dim = 8, 32, 16
    bound = 1.0 / jnp.sqrt(jnp.float32(input_dim))
    x = jax.random.normal(keys[0], (batch, input_dim), dtype=jnp.float32)
    w = jax.random.uniform(keys[1], (input_dim, output_dim), jnp.float32,
                           -bound, bound)
    b = jax.random.uniform(keys[2], (output_dim,), jnp.float32, -bound, bound)

    lin = PallasLinear(w, b)          # weight/bias padded once here
    y = lin(x)
    jax.block_until_ready(y)
    y_ref = jnp.dot(x, w, precision=jax.lax.Precision.HIGHEST) + b
    assert y.shape == (batch, output_dim)
    assert jnp.allclose(y, y_ref, atol=1e-5, rtol=1e-5)

    # --- Multi-tile check: M/N/K grid axes + padded (non-multiple) tails ---
    M2, K2, N2 = 520, 384, 272
    bound2 = 1.0 / jnp.sqrt(jnp.float32(K2))
    x2 = jax.random.normal(keys[3], (M2, K2), dtype=jnp.float32)
    w2 = jax.random.uniform(keys[4], (K2, N2), jnp.float32, -bound2, bound2)
    b2 = jax.random.uniform(keys[5], (N2,), jnp.float32, -bound2, bound2)

    y2 = linear_forward(x2, w2, b2)
    jax.block_until_ready(y2)
    y2_ref = jnp.dot(x2, w2, precision=jax.lax.Precision.HIGHEST) + b2
    assert y2.shape == (M2, N2)
    assert jnp.allclose(y2, y2_ref, atol=1e-3, rtol=1e-3)

    # --- bf16-compute path (f32 accumulate), as used on v6e/v7x ---
    y3 = PallasLinear(w2, b2, compute_dtype=jnp.bfloat16)(x2)
    jax.block_until_ready(y3)
    assert jnp.allclose(y3, y2_ref, atol=5e-2, rtol=5e-2)

    # --- narrow-output path (exercises the f32-scratch kernel) ---
    y4 = PallasLinear(w, b, compute_dtype=jnp.bfloat16,
                      out_dtype=jnp.bfloat16)(x)
    jax.block_until_ready(y4)
    assert jnp.allclose(y4.astype(jnp.float32), y_ref, atol=5e-2, rtol=5e-2)

    print("KERNEL_OK")
</pallas_src>

<mosaic_0001>
module attributes {stable_mosaic.version = 11 : i64} {
  func.func @_linear_kernel_acc_out(%arg0: i32, %arg1: i32, %arg2: i32, %arg3: memref<8x128xf32, #tpu.memory_space<vmem>>, %arg4: memref<128x128xf32, #tpu.memory_space<vmem>>, %arg5: memref<1x128xf32, #tpu.memory_space<vmem>>, %arg6: memref<8x128xf32, #tpu.memory_space<vmem>>) attributes {dimension_semantics = [#tpu.dimension_semantics<parallel>, #tpu.dimension_semantics<parallel>, #tpu.dimension_semantics<arbitrary>], iteration_bounds = array<i64: 1, 1, 1>, scalar_prefetch = 0 : i64, scratch_operands = 0 : i64, tpu.core_type = #tpu.core_type<tc>, window_params = [{transform_indices = @transform_0, window_bounds = array<i64: 8, 128>}, {transform_indices = @transform_1, window_bounds = array<i64: 128, 128>}, {transform_indices = @transform_2, window_bounds = array<i64: 1, 128>}, {transform_indices = @transform_3, window_bounds = array<i64: 8, 128>}]} {
    %c0_i32 = arith.constant 0 : i32
    %0 = arith.cmpi eq, %arg2, %c0_i32 : i32
    %1 = arith.extui %0 : i1 to i32
    %c0_i32_0 = arith.constant 0 : i32
    %2 = arith.cmpi ne, %1, %c0_i32_0 : i32
    scf.if %2 {
      %c0_8 = arith.constant 0 : index
      %c0_9 = arith.constant 0 : index
      %9 = vector.load %arg5[%c0_8, %c0_9] : memref<1x128xf32, #tpu.memory_space<vmem>>, vector<1x128xf32>
      %10 = vector.shape_cast %9 : vector<1x128xf32> to vector<1x128xf32>
      %11 = vector.broadcast %10 : vector<1x128xf32> to vector<8x128xf32>
      %c0_10 = arith.constant 0 : index
      %c0_11 = arith.constant 0 : index
      %12 = vector.load %arg6[%c0_10, %c0_11] : memref<8x128xf32, #tpu.memory_space<vmem>>, vector<8x128xf32>
      tpu.vector_store %arg6[%c0_10, %c0_11], %11 {strides = array<i32>} : memref<8x128xf32, #tpu.memory_space<vmem>>, vector<8x128xf32>,
    } else {
    }
    %c0 = arith.constant 0 : index
    %c0_1 = arith.constant 0 : index
    %3 = vector.load %arg6[%c0, %c0_1] : memref<8x128xf32, #tpu.memory_space<vmem>>, vector<8x128xf32>
    %c0_2 = arith.constant 0 : index
    %c0_3 = arith.constant 0 : index
    %4 = vector.load %arg3[%c0_2, %c0_3] : memref<8x128xf32, #tpu.memory_space<vmem>>, vector<8x128xf32>
    %c0_4 = arith.constant 0 : index
    %c0_5 = arith.constant 0 : index
    %5 = vector.load %arg4[%c0_4, %c0_5] : memref<128x128xf32, #tpu.memory_space<vmem>>, vector<128x128xf32>
    %cst = arith.constant dense<0.000000e+00> : vector<8x128xf32>
    %6 = tpu.matmul %4, %5, %cst {dimension_numbers = #tpu.dot_dimension_numbers<[1], [0], [0], [1], [0, 0, 1, 1], [], []>} : vector<8x128xf32>, vector<128x128xf32>, vector<8x128xf32> -> vector<8x128xf32>
    %7 = arith.addf %3, %6 : vector<8x128xf32>
    %c0_6 = arith.constant 0 : index
    %c0_7 = arith.constant 0 : index
    %8 = vector.load %arg6[%c0_6, %c0_7] : memref<8x128xf32, #tpu.memory_space<vmem>>, vector<8x128xf32>
    tpu.vector_store %arg6[%c0_6, %c0_7], %7 {strides = array<i32>} : memref<8x128xf32, #tpu.memory_space<vmem>>, vector<8x128xf32>,
    return
  }
  func.func @transform_0(%arg0: i32, %arg1: i32, %arg2: i32) -> (i32, i32) {
    %c0_i32 = arith.constant 0 : i32
    return %arg0, %arg2 : i32, i32
  }
  func.func @transform_1(%arg0: i32, %arg1: i32, %arg2: i32) -> (i32, i32) {
    %c0_i32 = arith.constant 0 : i32
    return %arg2, %arg1 : i32, i32
  }
  func.func @transform_2(%arg0: i32, %arg1: i32, %arg2: i32) -> (i32, i32) {
    %c0_i32 = arith.constant 0 : i32
    %c0_i32_0 = arith.constant 0 : i32
    return %c0_i32, %arg1 : i32, i32
  }
  func.func @transform_3(%arg0: i32, %arg1: i32, %arg2: i32) -> (i32, i32) {
    %c0_i32 = arith.constant 0 : i32
    return %arg0, %arg1 : i32, i32
  }
}

</mosaic_0001>

<llo_original>
// kernel: tpu_custom_call.1
$region0: #{tpu_custom_call.1}
  #allocation0 [shape = 'u32[]', space=smem, size = 0x4, offset = 0x4, fixed_abs, tag = 'smem constant byte address 0x4 - core index']
  #allocation1 [shape = 'u32[144,128]{1,0:T(1,128)}', space=vmem, size = 0x12000, scoped, tag = 'internal scratch']
  %s0 = inlined_call_operand.hbm [shape: f32[8,128], index: 0, kind: input, shape index: {}]
  %s1 = inlined_call_operand.hbm [shape: f32[128,128], index: 1, kind: input, shape index: {}]
  %s2 = inlined_call_operand.vmem [shape: f32[1,128], index: 2, kind: input, shape index: {}]
  %s3 = inlined_call_operand.hbm [shape: f32[8,128], index: 3, kind: output, shape index: {}]
  %s4 = sld [smem:[#allocation0]]
  $region34: #{tpu_custom_call.1} parent=0
    _
  %s6 = ssub.s32 1, %s4
  %s7 = scalar_select 0, %s6, %s4
  $region1: #{tpu_custom_call.1} parent=0
    #allocation2 [shape = 'u8[4096]{0}', space=vmem, size = 0x1000, scoped, tag = 'input window, operand 0, single buffered']
    #allocation3 [shape = 's32[1]{0}', space=sflag, size = 0x4, scoped, tag = 'scoped memory for tpu_custom_call.1']
    #allocation4 [shape = 's32[1]{0}', space=sflag, size = 0x4, scoped, tag = 'scoped memory for tpu_custom_call.1']
    #allocation5 [shape = 'u8[65536]{0}', space=vmem, size = 0x10000, scoped, tag = 'input window, operand 1, single buffered']
    #allocation6 [shape = 's32[1]{0}', space=sflag, size = 0x4, scoped, tag = 'scoped memory for tpu_custom_call.1']
    #allocation7 [shape = 'u8[4096]{0}', space=vmem, size = 0x1000, scoped, tag = 'output window, operand 0, single buffered']
    %8 = vsyncpa [#allocation3], 0
    %9 = vsyncpa [#allocation6], 0
    %10 = vsyncpa [#allocation4], 0
    // Predicated region
    $region2: #{tpu_custom_call.1} parent=1 // pred_check
      _
    $region3: #{tpu_custom_call.1} parent=1 // pred_check_branch
      %12 = sbr.rel (0) target = $region5
    $region4: #{tpu_custom_call.1} parent=1 // pred_region
      %s14 = ssub.s32 128, 128
      %15 = vsyncadd [#allocation3], %s14
      %s17 = sshll.u32 [#allocation2], 4
      %s18 = int_to_ptr.vmem [resolvable:$true] %s17
      %20 = dma.hbm_to_vmem [thread:$0]  %s0, 128, %s18, [#allocation3]
    $region5: #{tpu_custom_call.1} parent=1 // pred_fallthru
      _
    // Predicated region
    $region6: #{tpu_custom_call.1} parent=1 // pred_check
      _
    $region7: #{tpu_custom_call.1} parent=1 // pred_check_branch
      %22 = sbr.rel (0) target = $region9
    $region8: #{tpu_custom_call.1} parent=1 // pred_region
      %s24 = ssub.s32 2048, 2048
      %25 = vsyncadd [#allocation6], %s24
      %s26 = sshll.u32 [#allocation5], 4
      %s27 = int_to_ptr.vmem [resolvable:$true] %s26
      %32 = dma.hbm_to_vmem [thread:$0]  %s1, 2048, %s27, [#allocation6], 128, 128, 8
    $region9: #{tpu_custom_call.1} parent=1 // pred_fallthru
      _
    // Predicated region
    $region10: #{tpu_custom_call.1} parent=1 // pred_check
      _
    $region11: #{tpu_custom_call.1} parent=1 // pred_check_branch
      %34 = sbr.rel (0) target = $region13
    $region12: #{tpu_custom_call.1} parent=1 // pred_region
      _
    $region13: #{tpu_custom_call.1} parent=1 // pred_fallthru
      _
    // Predicated region
    $region14: #{tpu_custom_call.1} parent=1 // pred_check
      _
    $region15: #{tpu_custom_call.1} parent=1 // pred_check_branch
      %36 = sbr.rel (0) target = $region17
    $region16: #{tpu_custom_call.1} parent=1 // pred_region
      %37 = dma.done [#allocation3], 128
    $region17: #{tpu_custom_call.1} parent=1 // pred_fallthru
      _
    // Predicated region
    $region18: #{tpu_custom_call.1} parent=1 // pred_check
      _
    $region19: #{tpu_custom_call.1} parent=1 // pred_check_branch
      %39 = sbr.rel (0) target = $region21
    $region20: #{tpu_custom_call.1} parent=1 // pred_region
      %40 = dma.done [#allocation6], 2048
    $region21: #{tpu_custom_call.1} parent=1 // pred_fallthru
      _
    %p41 = scmp.eq.s32.totalorder 0, 0
    // Predicated region
    $region22: #{tpu_custom_call.1} parent=1 // pred_check
      %p42 = pneg %p41
    $region23: #{tpu_custom_call.1} parent=1 // pred_check_branch
      %44 = sbr.rel (%p42) target = $region25
    $region24: #{tpu_custom_call.1} parent=1 // pred_region
      %v45 = vld [vmem:[%s2] sm:$0x1]
      %v47 = vlaneseq
      %v48 = vshrl.u32 %v47, 7
      %v49 = vsub.s32 0, %v48
      %v50 = vrot.slane %v45, %v49
      %52 = vst [vmem:[#allocation7] sm:$0xff] %v50
    $region25: #{tpu_custom_call.1} parent=1 // pred_fallthru
      _
    %v53 = vld [vmem:[#allocation7] sm:$0xff]
    %v54 = vld [vmem:[#allocation2] sm:$0xff]
    %v55 = vld [vmem:[#allocation5] sm:$0xff]
    %v56 = vld [vmem:[#allocation5 + $0x8] sm:$0xff]
    %v57 = vld [vmem:[#allocation5 + $0x10] sm:$0xff]
    %v58 = vld [vmem:[#allocation5 + $0x18] sm:$0xff]
    %v59 = vld [vmem:[#allocation5 + $0x20] sm:$0xff]
    %v60 = vld [vmem:[#allocation5 + $0x28] sm:$0xff]
    %v61 = vld [vmem:[#allocation5 + $0x30] sm:$0xff]
    %v62 = vld [vmem:[#allocation5 + $0x38] sm:$0xff]
    %v63 = vld [vmem:[#allocation5 + $0x40] sm:$0xff]
    %v64 = vld [vmem:[#allocation5 + $0x48] sm:$0xff]
    %v65 = vld [vmem:[#allocation5 + $0x50] sm:$0xff]
    %v66 = vld [vmem:[#allocation5 + $0x58] sm:$0xff]
    %v67 = vld [vmem:[#allocation5 + $0x60] sm:$0xff]
    %v68 = vld [vmem:[#allocation5 + $0x68] sm:$0xff]
    %v69 = vld [vmem:[#allocation5 + $0x70] sm:$0xff]
    %v70 = vld [vmem:[#allocation5 + $0x78] sm:$0xff]
    %71 = vmatprep.subr.mxu0 0.0
    %72 = vmatpush1.msra.mxu0 %v55
    %73 = vmatprep.subr.mxu0 0.0
    %74 = vmatpush1.msra.mxu0 %v56
    %75 = vmatprep.subr.mxu0 0.0
    %76 = vmatpush1.msra.mxu0 %v57
    %77 = vmatprep.subr.mxu0 0.0
    %78 = vmatpush1.msra.mxu0 %v58
    %79 = vmatprep.subr.mxu0 0.0
    %80 = vmatpush1.msra.mxu0 %v59
    %81 = vmatprep.subr.mxu0 0.0
    %82 = vmatpush1.msra.mxu0 %v60
    %83 = vmatprep.subr.mxu0 0.0
    %84 = vmatpush1.msra.mxu0 %v61
    %85 = vmatprep.subr.mxu0 0.0
    %86 = vmatpush1.msra.mxu0 %v62
    %87 = vmatprep.subr.mxu0 0.0
    %88 = vmatpush1.msra.mxu0 %v63
    %89 = vmatprep.subr.mxu0 0.0
    %90 = vmatpush1.msra.mxu0 %v64
    %91 = vmatprep.subr.mxu0 0.0
    %92 = vmatpush1.msra.mxu0 %v65
    %93 = vmatprep.subr.mxu0 0.0
    %94 = vmatpush1.msra.mxu0 %v66
    %95 = vmatprep.subr.mxu0 0.0
    %96 = vmatpush1.msra.mxu0 %v67
    %97 = vmatprep.subr.mxu0 0.0
    %98 = vmatpush1.msra.mxu0 %v68
    %99 = vmatprep.subr.mxu0 0.0
    %100 = vmatpush1.msra.mxu0 %v69
    %101 = vmatprep.subr.mxu0 0.0
    %102 = vmatpush1.msra.mxu0 %v70
    %103 = vmatprep.subr.mxu0 0.0
    %104 = vmatpush1.msra.mxu0 0.0
    %105 = vmatprep.subr.mxu0 0.0
    %106 = vmatpush1.msra.mxu0 0.0
    %107 = vmatprep.subr.mxu0 0.0
    %108 = vmatpush1.msra.mxu0 0.0
    %109 = vmatprep.subr.mxu0 0.0
    %110 = vmatpush1.msra.mxu0 0.0
    %111 = vmatprep.subr.mxu0 0.0
    %112 = vmatpush1.msra.mxu0 0.0
    %113 = vmatprep.subr.mxu0 0.0
    %114 = vmatpush1.msra.mxu0 0.0
    %115 = vmatprep.subr.mxu0 0.0
    %116 = vmatpush1.msra.mxu0 0.0
    %117 = vmatprep.subr.mxu0 0.0
    %118 = vmatpush1.msra.mxu0 0.0
    %119 = vmatprep.subr.mxu0 0.0
    %120 = vmatpush1.msra.mxu0 0.0
    %121 = vmatprep.subr.mxu0 0.0
    %122 = vmatpush1.msra.mxu0 0.0
    %123 = vmatprep.subr.mxu0 0.0
    %124 = vmatpush1.msra.mxu0 0.0
    %125 = vmatprep.subr.mxu0 0.0
    %126 = vmatpush1.msra.mxu0 0.0
    %127 = vmatprep.subr.mxu0 0.0
    %128 = vmatpush1.msra.mxu0 0.0
    %129 = vmatprep.subr.mxu0 0.0
    %130 = vmatpush1.msra.mxu0 0.0
    %131 = vmatprep.subr.mxu0 0.0
    %132 = vmatpush1.msra.mxu0 0.0
    %133 = vmatprep.subr.mxu0 0.0
    %134 = vmatpush1.msra.mxu0 0.0
    %135 = vmatprep.mubr.f32.mxu0 0.0
    %136 = vmatmul.mubr.f32.gmra.mrb[0].mxu0 %v54
    %v137 = vpop.f32.mrb[0].mxu0
    %v138 = vadd.f32 0.0, %v137
    %v139 = vpop.f32.mrb[0].mxu0
    %140 = vdwg.mxu0
    %v141 = vadd.f32 %v53, %v138
    %142 = vst [vmem:[#allocation7] sm:$0xff] %v141
    // Predicated region
    $region26: #{tpu_custom_call.1} parent=1 // pred_check
      _
    $region27: #{tpu_custom_call.1} parent=1 // pred_check_branch
      %144 = sbr.rel (0) target = $region29
    $region28: #{tpu_custom_call.1} parent=1 // pred_region
      %s146 = ssub.s32 128, 128
      %147 = vsyncadd [#allocation4], %s146
      %s149 = sshll.u32 [#allocation7], 4
      %s150 = int_to_ptr.vmem [resolvable:$true] %s149
      %152 = dma.vmem_to_hbm [thread:$0]  %s150, 128, %s3, [#allocation4]
    $region29: #{tpu_custom_call.1} parent=1 // pred_fallthru
      _
    // Predicated region
    $region30: #{tpu_custom_call.1} parent=1 // pred_check
      _
    $region31: #{tpu_custom_call.1} parent=1 // pred_check_branch
      %154 = sbr.rel (0) target = $region33
    $region32: #{tpu_custom_call.1} parent=1 // pred_region
      %155 = dma.done [#allocation4], 128
    $region33: #{tpu_custom_call.1} parent=1 // pred_fallthru
      _
    %156 = vsyncpa [#allocation3], 1
    %157 = vsyncpa [#allocation6], 1
    %158 = vsyncpa [#allocation4], 1

</llo_original>
